<compile_context>
chip_gen: v6e
topology: v6e:2x2x1
jax: 0.10.0
libtpu: 0.0.40
codegen_flags: <defaults>
</compile_context>

<pallas_src>
import functools
import math

import jax
import jax.numpy as jnp
from jax.experimental import pallas as pl
from jax.experimental.pallas import tpu as pltpu


def _round_up(x: int, m: int) -> int:
    return ((x + m - 1) // m) * m


# ----------------------------------------------------------------------------
# Kernel body: two MXU dots + store.  All layout/scale work lives outside.
# ----------------------------------------------------------------------------
def _lora_kernel(x_ref, a_ref, b_ref, o_ref, *, compute_dtype):
    # x_ref: (TM, in_f)      native input dtype (cast here on the VPU -- free)
    # a_ref: (in_f, rank)    compute_dtype, alpha/rank scale already folded in
    # b_ref: (rank, out_f)   compute_dtype
    x = x_ref[...]
    if x.dtype != compute_dtype:
        x = x.astype(compute_dtype)
    xa = jnp.dot(x, a_ref[...], preferred_element_type=jnp.float32)
    # Keep the (TM, rank) intermediate in f32: MXU slack is enormous at small
    # rank, and this removes one rounding stage (review item).
    y = jnp.dot(xa, b_ref[...].astype(jnp.float32),
                preferred_element_type=jnp.float32)
    o_ref[...] = y.astype(o_ref.dtype)


# ----------------------------------------------------------------------------
# Wrapper-side weight prep (done once per layer, not per call).
# ----------------------------------------------------------------------------
def prepare_lora_weights(lora_A, lora_B, scale, compute_dtype=jnp.bfloat16):
    """Fold alpha/rank into A, pre-transpose both, cast to compute dtype."""
    a_t = (lora_A.astype(jnp.float32) * scale).T.astype(compute_dtype)  # (in, r)
    b_t = lora_B.T.astype(compute_dtype)                                # (r, out)
    return a_t, b_t


def _fit_tile_m(tm, in_f, out_f, rank, xb, ob, cb, budget=40 * 2**20):
    """Shrink the row tile until the double-buffered footprint fits VMEM."""
    while tm > 64:
        need = (2 * tm * in_f * xb + 2 * tm * out_f * ob
                + 2 * (in_f * rank + rank * out_f) * cb)
        if need <= budget:
            break
        tm = max(64, _round_up(tm // 2, 16))
    return tm


# ----------------------------------------------------------------------------
# (M, in_f) -> (M, out_f) = x @ a_t @ b_t   (scale already folded into a_t)
# ----------------------------------------------------------------------------
@functools.partial(jax.jit, static_argnames=("tile_m", "out_dtype"))
def lora_apply(x2d, a_t, b_t, tile_m=512, out_dtype=None):
    M, in_features = x2d.shape
    rank, out_features = b_t.shape
    assert a_t.shape == (in_features, rank)
    out_dtype = x2d.dtype if out_dtype is None else jnp.dtype(out_dtype)
    compute_dtype = a_t.dtype

    xb = jnp.dtype(x2d.dtype).itemsize
    cb = jnp.dtype(compute_dtype).itemsize
    ob = jnp.dtype(out_dtype).itemsize

    # Row tile: large (amortize ~0.35us/grid-step; v6e/v7x benefit most),
    # clamped for tiny M, 16-aligned (safe for f32 (8,128) and bf16 (16,128)),
    # shrunk if the double-buffered footprint would blow VMEM.
    tm = max(16, min(int(tile_m), _round_up(M, 16)))
    tm = _round_up(tm, 16)
    tm = _fit_tile_m(tm, in_features, out_features, rank, xb, ob, cb)
    grid_m = pl.cdiv(M, tm)  # ragged tail handled by Pallas masking: no pad/slice passes

    # VMEM request: actual footprint + 50% margin, capped at 48 MiB so it is
    # safe on v7x's 64 MiB physical VMEM (weights counted double-buffered to
    # be conservative).
    need = (2 * tm * in_features * xb + 2 * tm * out_features * ob
            + 2 * (in_features * rank + rank * out_features) * cb)
    vmem_limit = int(min(max(int(need * 1.5), 32 * 2**20), 48 * 2**20))

    cost = pl.CostEstimate(
        flops=2 * M * rank * (in_features + out_features),
        transcendentals=0,
        bytes_accessed=(M * in_features * xb + M * out_features * ob
                        + (in_features * rank + rank * out_features) * cb))

    kernel = functools.partial(_lora_kernel, compute_dtype=compute_dtype)
    return pl.pallas_call(
        kernel,
        out_shape=jax.ShapeDtypeStruct((M, out_features), out_dtype),
        grid=(grid_m,),
        in_specs=[
            pl.BlockSpec((tm, in_features), lambda i: (i, 0)),
            pl.BlockSpec((in_features, rank), lambda i: (0, 0)),   # resident weights
            pl.BlockSpec((rank, out_features), lambda i: (0, 0)),  # resident weights
        ],
        out_specs=pl.BlockSpec((tm, out_features), lambda i: (i, 0)),
        compiler_params=pltpu.CompilerParams(
            dimension_semantics=("parallel",),
            vmem_limit_bytes=vmem_limit,
        ),
        cost_estimate=cost,
    )(x2d, a_t, b_t)


# ----------------------------------------------------------------------------
# Module port
# ----------------------------------------------------------------------------
class LoRARolloutPallas:
    """JAX/Pallas port of LoRARollout (mode='single' or 'all')."""

    def __init__(self, in_features, out_features, rank=8, alpha=8,
                 dropout=0.0, max_steps=40, mode="single", key=None,
                 zero_init_B=True, compute_dtype=jnp.bfloat16):
        assert rank > 0, "The rank must be > 0."
        assert mode in ("single", "all"), f"Invalid mode: {mode}"
        self.in_features = in_features
        self.out_features = out_features
        self.rank = rank
        self.alpha = alpha
        self.max_steps = max_steps
        self.mode = mode
        self.scale = alpha / rank
        self.compute_dtype = compute_dtype
        n_layers = max_steps if mode == "all" else 1

        if key is None:
            key = jax.random.PRNGKey(0)

        # Faithful PyTorch init: kaiming_uniform_(a=sqrt(5)) for A -> bound =
        # 1/sqrt(in_features); zeros for B (correction is exactly 0 at init).
        # zero_init_B=False draws a small uniform B for non-trivial testing.
        bound_a = 1.0 / math.sqrt(in_features)
        self.As, self.Bs = [], []
        for i in range(n_layers):
            ka, kb = jax.random.split(jax.random.fold_in(key, i))
            A = jax.random.uniform(ka, (rank, in_features), jnp.float32,
                                   minval=-bound_a, maxval=bound_a)
            if zero_init_B:
                B = jnp.zeros((out_features, rank), jnp.float32)
            else:
                B = jax.random.uniform(kb, (out_features, rank), jnp.float32,
                                       minval=-0.1, maxval=0.1)
            self.As.append(A)
            self.Bs.append(B)

        # Prepared (scale-folded, transposed, cast) weights cached per layer
        # so per-rollout-step calls do zero prep work.
        self.prepared = [prepare_lora_weights(A, B, self.scale, compute_dtype)
                         for A, B in zip(self.As, self.Bs)]

    def set_weights(self, A, B, index=0):
        """Replace a layer's (A, B) (e.g. fine-tuned params) and re-prepare."""
        self.As[index] = jnp.asarray(A, jnp.float32)
        self.Bs[index] = jnp.asarray(B, jnp.float32)
        self.prepared[index] = prepare_lora_weights(
            self.As[index], self.Bs[index], self.scale, self.compute_dtype)

    def __call__(self, x, step: int, *, tile_m=512, out_dtype=None):
        assert step >= 0, f"Step must be non-negative, found {step}."
        assert self.mode in ("single", "all")
        if step >= self.max_steps:
            # PyTorch returns zeros with the INPUT's shape in this branch.
            return jnp.zeros_like(x)
        idx = 0 if self.mode == "single" else min(step, len(self.prepared) - 1)
        a_t, b_t = self.prepared[idx]

        lead_shape = x.shape[:-1]
        x2d = x.reshape(-1, self.in_features)
        # TODO(synk): dropout>0 (train-mode Bernoulli masking) not implemented;
        # the default dropout=0.0 is an identity, which is what we reproduce.
        y2d = lora_apply(x2d, a_t, b_t, tile_m=tile_m, out_dtype=out_dtype)
        return y2d.reshape(*lead_shape, self.out_features)


if __name__ == "__main__":
    key = jax.random.PRNGKey(0)
    batch, seq, in_features, out_features, rank = 2, 8, 32, 32, 8

    x = jax.random.normal(key, (batch, seq, in_features), jnp.float32)

    # 1) Faithful init (B = zeros, like PyTorch) -> correction is exactly 0.
    mod_faithful = LoRARolloutPallas(in_features, out_features, rank=rank,
                                     alpha=8, max_steps=40, mode="single",
                                     key=jax.random.PRNGKey(0))
    out0 = jax.block_until_ready(mod_faithful(x, step=0))
    assert out0.shape == (batch, seq, out_features)
    assert bool(jnp.all(out0 == 0)), "faithful zero-init B must give zero output"

    # 2) Non-trivial weights: compare against a pure-JAX f32 reference.
    mod_bf16 = LoRARolloutPallas(in_features, out_features, rank=rank, alpha=8,
                                 max_steps=40, mode="single",
                                 key=jax.random.PRNGKey(0), zero_init_B=False,
                                 compute_dtype=jnp.bfloat16)
    mod_f32 = LoRARolloutPallas(in_features, out_features, rank=rank, alpha=8,
                                max_steps=40, mode="single",
                                key=jax.random.PRNGKey(0), zero_init_B=False,
                                compute_dtype=jnp.float32)

    A, B = mod_bf16.As[0], mod_bf16.Bs[0]
    hp = jax.lax.Precision.HIGHEST
    x2d = x.reshape(-1, in_features)
    ref2d = mod_bf16.scale * jnp.dot(jnp.dot(x2d, A.T, precision=hp),
                                     B.T, precision=hp)
    ref = ref2d.reshape(batch, seq, out_features)

    out_bf16 = jax.block_until_ready(mod_bf16(x, step=0))
    assert out_bf16.shape == (batch, seq, out_features)
    assert jnp.allclose(out_bf16, ref, atol=2e-2, rtol=2e-2), (
        f"bf16 path mismatch: max |err| = "
        f"{float(jnp.max(jnp.abs(out_bf16 - ref)))}")

    out_f32 = jax.block_until_ready(mod_f32(x, step=0))
    assert jnp.allclose(out_f32, ref, atol=1e-3, rtol=1e-3), (
        f"f32 path mismatch: max |err| = "
        f"{float(jnp.max(jnp.abs(out_f32 - ref)))}")

    # 3) Optional bf16 output stream (byte-reduction path).
    out_bf16_out = jax.block_until_ready(
        mod_bf16(x, step=0, out_dtype=jnp.bfloat16))
    assert out_bf16_out.dtype == jnp.bfloat16
    assert out_bf16_out.shape == (batch, seq, out_features)

    # 4) Ragged row count (batch*seq not a multiple of the tile): handled by
    #    the cdiv grid + masked tail block -- no pad/slice passes.
    x_odd = jax.random.normal(jax.random.fold_in(key, 1),
                              (3, 7, in_features), jnp.float32)
    ref_odd = (mod_bf16.scale
               * jnp.dot(jnp.dot(x_odd.reshape(-1, in_features), A.T,
                                 precision=hp), B.T, precision=hp)
               ).reshape(3, 7, out_features)
    out_odd = jax.block_until_ready(mod_bf16(x_odd, step=0))
    assert out_odd.shape == (3, 7, out_features)
    assert jnp.allclose(out_odd, ref_odd, atol=2e-2, rtol=2e-2)

    # 5) step >= max_steps path returns zeros shaped like the INPUT.
    out_big = jax.block_until_ready(mod_bf16(x, step=100))
    assert out_big.shape == x.shape and bool(jnp.all(out_big == 0))

    print("KERNEL_OK")
</pallas_src>

<mosaic_0001>
module attributes {stable_mosaic.version = 11 : i64} {
  func.func @_lora_kernel(%arg0: i32, %arg1: memref<16x32xf32, #tpu.memory_space<vmem>>, %arg2: memref<32x8xbf16, #tpu.memory_space<vmem>>, %arg3: memref<8x32xbf16, #tpu.memory_space<vmem>>, %arg4: memref<16x32xf32, #tpu.memory_space<vmem>>) attributes {dimension_semantics = [#tpu.dimension_semantics<parallel>], iteration_bounds = array<i64: 1>, scalar_prefetch = 0 : i64, scratch_operands = 0 : i64, tpu.core_type = #tpu.core_type<tc>, window_params = [{transform_indices = @transform_0, window_bounds = array<i64: 16, 32>}, {pipeline_mode = #tpu.pipeline_mode<synchronous>, transform_indices = @transform_1, window_bounds = array<i64: 32, 8>}, {pipeline_mode = #tpu.pipeline_mode<synchronous>, transform_indices = @transform_2, window_bounds = array<i64: 8, 32>}, {transform_indices = @transform_3, window_bounds = array<i64: 16, 32>}]} {
    %c0 = arith.constant 0 : index
    %c0_0 = arith.constant 0 : index
    %0 = vector.load %arg1[%c0, %c0_0] : memref<16x32xf32, #tpu.memory_space<vmem>>, vector<16x32xf32>
    %1 = arith.truncf %0 : vector<16x32xf32> to vector<16x32xbf16>
    %c0_1 = arith.constant 0 : index
    %c0_2 = arith.constant 0 : index
    %2 = vector.load %arg2[%c0_1, %c0_2] : memref<32x8xbf16, #tpu.memory_space<vmem>>, vector<32x8xbf16>
    %cst = arith.constant dense<0.000000e+00> : vector<16x8xf32>
    %3 = tpu.matmul %1, %2, %cst {dimension_numbers = #tpu.dot_dimension_numbers<[1], [0], [0], [1], [0, 0, 1, 1], [], []>} : vector<16x32xbf16>, vector<32x8xbf16>, vector<16x8xf32> -> vector<16x8xf32>
    %c0_3 = arith.constant 0 : index
    %c0_4 = arith.constant 0 : index
    %4 = vector.load %arg3[%c0_3, %c0_4] : memref<8x32xbf16, #tpu.memory_space<vmem>>, vector<8x32xbf16>
    %5 = arith.extf %4 : vector<8x32xbf16> to vector<8x32xf32>
    %cst_5 = arith.constant dense<0.000000e+00> : vector<16x32xf32>
    %6 = tpu.matmul %3, %5, %cst_5 {dimension_numbers = #tpu.dot_dimension_numbers<[1], [0], [0], [1], [0, 0, 1, 1], [], []>} : vector<16x8xf32>, vector<8x32xf32>, vector<16x32xf32> -> vector<16x32xf32>
    %c0_6 = arith.constant 0 : index
    %c0_7 = arith.constant 0 : index
    %7 = vector.load %arg4[%c0_6, %c0_7] : memref<16x32xf32, #tpu.memory_space<vmem>>, vector<16x32xf32>
    tpu.vector_store %arg4[%c0_6, %c0_7], %6 {strides = array<i32>} : memref<16x32xf32, #tpu.memory_space<vmem>>, vector<16x32xf32>,
    return
  }
  func.func @transform_0(%arg0: i32) -> (i32, i32) {
    %c0_i32 = arith.constant 0 : i32
    %c0_i32_0 = arith.constant 0 : i32
    return %arg0, %c0_i32 : i32, i32
  }
  func.func @transform_1(%arg0: i32) -> (i32, i32) {
    %c0_i32 = arith.constant 0 : i32
    %c0_i32_0 = arith.constant 0 : i32
    %c0_i32_1 = arith.constant 0 : i32
    return %c0_i32, %c0_i32_0 : i32, i32
  }
  func.func @transform_2(%arg0: i32) -> (i32, i32) {
    %c0_i32 = arith.constant 0 : i32
    %c0_i32_0 = arith.constant 0 : i32
    %c0_i32_1 = arith.constant 0 : i32
    return %c0_i32, %c0_i32_0 : i32, i32
  }
  func.func @transform_3(%arg0: i32) -> (i32, i32) {
    %c0_i32 = arith.constant 0 : i32
    %c0_i32_0 = arith.constant 0 : i32
    return %arg0, %c0_i32 : i32, i32
  }
}

</mosaic_0001>

<llo_original>
// kernel: lora_apply.1
$region0: #{lora_apply.1}
  #allocation0 [shape = 'u32[]', space=smem, size = 0x4, offset = 0x4, fixed_abs, tag = 'smem constant byte address 0x4 - core index']
  #allocation1 [shape = 'u32[144,128]{1,0:T(1,128)}', space=vmem, size = 0x12000, scoped, tag = 'internal scratch']
  %s0 = inlined_call_operand.vmem [shape: f32[16,32], index: 0, kind: input, shape index: {}]
  %s1 = inlined_call_operand.vmem [shape: bf16[32,8], index: 1, kind: input, shape index: {}]
  %s2 = inlined_call_operand.vmem [shape: bf16[8,32], index: 2, kind: input, shape index: {}]
  %s3 = inlined_call_operand.hbm [shape: f32[16,32], index: 3, kind: output, shape index: {}]
  %s4 = sld [smem:[#allocation0]]
  $region22: #{lora_apply.1} parent=0
    _
  %s6 = ssub.s32 1, %s4
  %s7 = scalar_select 0, %s6, %s4
  $region1: #{lora_apply.1} parent=0
    #allocation2 [shape = 'u8[8192]{0}', space=vmem, size = 0x2000, scoped, tag = 'output window, operand 0, single buffered']
    #allocation3 [shape = 's32[1]{0}', space=sflag, size = 0x4, scoped, tag = 'scoped memory for lora_apply.1']
    %8 = vsyncpa [#allocation3], 0
    // Predicated region
    $region2: #{lora_apply.1} parent=1 // pred_check
      _
    $region3: #{lora_apply.1} parent=1 // pred_check_branch
      %10 = sbr.rel (0) target = $region5
    $region4: #{lora_apply.1} parent=1 // pred_region
      _
    $region5: #{lora_apply.1} parent=1 // pred_fallthru
      _
    // Predicated region
    $region6: #{lora_apply.1} parent=1 // pred_check
      _
    $region7: #{lora_apply.1} parent=1 // pred_check_branch
      %12 = sbr.rel (0) target = $region9
    $region8: #{lora_apply.1} parent=1 // pred_region
      _
    $region9: #{lora_apply.1} parent=1 // pred_fallthru
      _
    // Predicated region
    $region10: #{lora_apply.1} parent=1 // pred_check
      _
    $region11: #{lora_apply.1} parent=1 // pred_check_branch
      %14 = sbr.rel (0) target = $region13
    $region12: #{lora_apply.1} parent=1 // pred_region
      _
    $region13: #{lora_apply.1} parent=1 // pred_fallthru
      _
    %v16 = vld [vmem:[%s0] sm:$0xff]
    %v17 = vld [vmem:[%s0 + $0x8] sm:$0xff]
    %v18 = vpack.c.bf16 %v17, %v16
    %v19 = vld [vmem:[%s1] sm:$0xf]
    %v20 = vld [vmem:[%s1 + $0x4] sm:$0xf]
    %v21 = vld [vmem:[%s1 + $0x8] sm:$0xf]
    %v22 = vld [vmem:[%s1 + $0xc] sm:$0xf]
    %v27 = vunpack.c.l.b16 %v19
    %v28 = vunpack.c.l.b16 %v20
    %v29 = vunpack.c.l.b16 %v21
    %v30 = vunpack.c.l.b16 %v22
    %v31 = vpack.c.b16 %v28, %v27
    %v32 = vpack.c.b16 %v30, %v29
    %vm35 = vcmask 261120
    %v37 = vsel %vm35, %v18, 0
    %39 = vmatprep.subr.bf16.mxu0 0
    %40 = vmatpush1.bf16.msra.mxu0 0
    %41 = vmatprep.subr.bf16.mxu0 0
    %42 = vmatpush1.bf16.msra.mxu0 0
    %43 = vmatprep.subr.bf16.mxu0 0
    %44 = vmatpush1.bf16.msra.mxu0 0
    %45 = vmatprep.subr.bf16.mxu0 0
    %46 = vmatpush1.bf16.msra.mxu0 0
    %47 = vmatprep.subr.bf16.mxu0 0
    %48 = vmatpush1.bf16.msra.mxu0 0
    %49 = vmatprep.subr.bf16.mxu0 0
    %50 = vmatpush1.bf16.msra.mxu0 0
    %51 = vmatprep.subr.bf16.mxu0 0
    %52 = vmatpush1.bf16.msra.mxu0 %v32
    %53 = vmatprep.subr.bf16.mxu0 0
    %54 = vmatpush1.bf16.msra.mxu0 %v31
    %55 = vmatprep.subr.bf16.mxu0 0
    %56 = vmatpush2.bf16.msra.mxu0 0
    %57 = vmatprep.subr.bf16.mxu0 0
    %58 = vmatpush2.bf16.msra.mxu0 0
    %59 = vmatprep.subr.bf16.mxu0 0
    %60 = vmatpush2.bf16.msra.mxu0 0
    %61 = vmatprep.subr.bf16.mxu0 0
    %62 = vmatpush2.bf16.msra.mxu0 0
    %63 = vmatprep.subr.bf16.mxu0 0
    %64 = vmatpush2.bf16.msra.mxu0 0
    %65 = vmatprep.subr.bf16.mxu0 0
    %66 = vmatpush2.bf16.msra.mxu0 0
    %67 = vmatprep.subr.bf16.mxu0 0
    %68 = vmatpush2.bf16.msra.mxu0 0
    %69 = vmatprep.subr.bf16.mxu0 0
    %70 = vmatpush2.bf16.msra.mxu0 0
    %71 = vmatprep.mubr.bf16.mxu0 0
    %72 = vmatmul.mubr.bf16.gmra.mxu0 %v37
    %v73 = vpop.f32.mrf.mxu0
    %v74 = vadd.f32 0.0, %v73
    %v75 = vpop.f32.mrf.mxu0
    %v76 = vpop.f32.mrf.mxu0
    %v77 = vadd.f32 0.0, %v76
    %v78 = vpop.f32.mrf.mxu0
    %79 = vdwg.mxu0
    %v80 = vld [vmem:[%s2] sm:$0xf]
    %v81 = vunpack.c.l.bf16 %v80
    %vm82 = vcmask 64512
    %v84 = vsel %vm82, %v74, 0
    %v87 = vsel %vm82, %v77, 0
    %89 = vmatprep.subr.mxu0 0.0
    %90 = vmatpush1.msra.mxu0 0.0
    %91 = vmatprep.subr.mxu0 0.0
    %92 = vmatpush1.msra.mxu0 0.0
    %93 = vmatprep.subr.mxu0 0.0
    %94 = vmatpush1.msra.mxu0 0.0
    %95 = vmatprep.subr.mxu0 0.0
    %96 = vmatpush1.msra.mxu0 0.0
    %97 = vmatprep.subr.mxu0 0.0
    %98 = vmatpush1.msra.mxu0 0.0
    %99 = vmatprep.subr.mxu0 0.0
    %100 = vmatpush1.msra.mxu0 0.0
    %101 = vmatprep.subr.mxu0 0.0
    %102 = vmatpush1.msra.mxu0 0.0
    %103 = vmatprep.subr.mxu0 0.0
    %104 = vmatpush1.msra.mxu0 0.0
    %105 = vmatprep.subr.mxu0 0.0
    %106 = vmatpush1.msra.mxu0 0.0
    %107 = vmatprep.subr.mxu0 0.0
    %108 = vmatpush1.msra.mxu0 0.0
    %109 = vmatprep.subr.mxu0 0.0
    %110 = vmatpush1.msra.mxu0 0.0
    %111 = vmatprep.subr.mxu0 0.0
    %112 = vmatpush1.msra.mxu0 0.0
    %113 = vmatprep.subr.mxu0 0.0
    %114 = vmatpush1.msra.mxu0 0.0
    %115 = vmatprep.subr.mxu0 0.0
    %116 = vmatpush1.msra.mxu0 0.0
    %117 = vmatprep.subr.mxu0 0.0
    %118 = vmatpush1.msra.mxu0 0.0
    %119 = vmatprep.subr.mxu0 0.0
    %120 = vmatpush1.msra.mxu0 %v81
    %121 = vmatprep.subr.mxu0 0.0
    %122 = vmatpush2.msra.mxu0 0.0
    %123 = vmatprep.subr.mxu0 0.0
    %124 = vmatpush2.msra.mxu0 0.0
    %125 = vmatprep.subr.mxu0 0.0
    %126 = vmatpush2.msra.mxu0 0.0
    %127 = vmatprep.subr.mxu0 0.0
    %128 = vmatpush2.msra.mxu0 0.0
    %129 = vmatprep.subr.mxu0 0.0
    %130 = vmatpush2.msra.mxu0 0.0
    %131 = vmatprep.subr.mxu0 0.0
    %132 = vmatpush2.msra.mxu0 0.0
    %133 = vmatprep.subr.mxu0 0.0
    %134 = vmatpush2.msra.mxu0 0.0
    %135 = vmatprep.subr.mxu0 0.0
    %136 = vmatpush2.msra.mxu0 0.0
    %137 = vmatprep.subr.mxu0 0.0
    %138 = vmatpush2.msra.mxu0 0.0
    %139 = vmatprep.subr.mxu0 0.0
    %140 = vmatpush2.msra.mxu0 0.0
    %141 = vmatprep.subr.mxu0 0.0
    %142 = vmatpush2.msra.mxu0 0.0
    %143 = vmatprep.subr.mxu0 0.0
    %144 = vmatpush2.msra.mxu0 0.0
    %145 = vmatprep.subr.mxu0 0.0
    %146 = vmatpush2.msra.mxu0 0.0
    %147 = vmatprep.subr.mxu0 0.0
    %148 = vmatpush2.msra.mxu0 0.0
    %149 = vmatprep.subr.mxu0 0.0
    %150 = vmatpush2.msra.mxu0 0.0
    %151 = vmatprep.subr.mxu0 0.0
    %152 = vmatpush2.msra.mxu0 0.0
    %153 = vmatprep.mubr.f32.mxu0 0.0
    %154 = vmatmul.mubr.f32.gmra.mxu0 %v84
    %v155 = vpop.f32.mrf.mxu0
    %v156 = vadd.f32 0.0, %v155
    %v157 = vpop.f32.mrf.mxu0
    %158 = vmatprep.mubr.f32.mxu0 0.0
    %159 = vmatmul.mubr.f32.gmra.mxu0 %v87
    %v160 = vpop.f32.mrf.mxu0
    %v161 = vadd.f32 0.0, %v160
    %v162 = vpop.f32.mrf.mxu0
    %163 = vdwg.mxu0
    %164 = vst.msk [vmem:[#allocation2] sm:$0xff] %vm35, %v156
    %165 = vst.msk [vmem:[#allocation2 + $0x8] sm:$0xff] %vm35, %v161
    // Predicated region
    $region14: #{lora_apply.1} parent=1 // pred_check
      _
    $region15: #{lora_apply.1} parent=1 // pred_check_branch
      %167 = sbr.rel (0) target = $region17
    $region16: #{lora_apply.1} parent=1 // pred_region
      %s169 = ssub.s32 256, 256
      %170 = vsyncadd [#allocation3], %s169
      %s171 = sshll.u32 [#allocation2], 4
      %s172 = int_to_ptr.vmem [resolvable:$true] %s171
      %177 = dma.vmem_to_hbm [thread:$0]  %s172, 256, %s3, [#allocation3], 128, 128, 8
    $region17: #{lora_apply.1} parent=1 // pred_fallthru
      _
    // Predicated region
    $region18: #{lora_apply.1} parent=1 // pred_check
      _
    $region19: #{lora_apply.1} parent=1 // pred_check_branch
      %179 = sbr.rel (0) target = $region21
    $region20: #{lora_apply.1} parent=1 // pred_region
      %180 = dma.done [#allocation3], 256
    $region21: #{lora_apply.1} parent=1 // pred_fallthru
      _
    %181 = vsyncpa [#allocation3], 1

</llo_original>
